<compile_context>
chip_gen: v6e
topology: v6e:2x2x1
jax: 0.10.0
libtpu: 0.0.40
codegen_flags: <defaults>
</compile_context>

<pallas_src>
import jax
import jax.numpy as jnp
from jax import lax
from jax.experimental import pallas as pl
from jax.experimental.pallas import tpu as pltpu


def _round_up(x, m):
    return ((x + m - 1) // m) * m


def _cdiv(a, b):
    return -(-a // b)


def _pick_tile(batch, block_b):
    """Batch tile: >=2 grid steps when possible (v7x megacore), <=8 rows of pad waste."""
    b8 = _round_up(max(batch, 8), 8)
    n_tiles = max(_cdiv(b8, block_b), 2 if b8 >= 16 else 1)
    return min(block_b, _round_up(_cdiv(b8, n_tiles), 8))


def item_tower_kernel(x_ref, w1_ref, b1_ref, w2_ref, b2_ref, out_ref, xpad_ref):
    # Zero the padded-lane scratch, then place the real columns (masked lane store).
    # Zeroing every step (not only at program_id == 0) keeps the pad lanes valid on
    # every core when the "parallel" batch axis is split across TensorCores.
    xpad_ref[...] = jnp.zeros_like(xpad_ref)
    xpad_ref[:, : x_ref.shape[1]] = x_ref[...]

    # Fused first layer: (TB, 128) @ (128, 128) + (1, 128), f32 accumulation.
    h = jnp.dot(xpad_ref[...], w1_ref[...],
                preferred_element_type=jnp.float32) + b1_ref[...]
    h = jnp.maximum(h, 0.0).astype(jnp.bfloat16)   # ReLU; bf16 operand for 2nd MXU pass

    # Second layer: (TB, 128) @ (128, 32) + (1, 32).
    out = jnp.dot(h, w2_ref[...], preferred_element_type=jnp.float32) + b2_ref[...]

    # F.normalize(out, dim=-1): v / max(||v||, eps) == v * rsqrt(max(sum(v^2), eps^2)).
    ss = jnp.sum(out * out, axis=-1, keepdims=True)
    out_ref[...] = out * lax.rsqrt(jnp.maximum(ss, 1e-24))


def init_params(key, num_movies, num_years, num_genres, emb_dim=32, hidden=128):
    ks = jax.random.split(key, 8)

    def lin_init(k, fan_in, shape):
        bound = 1.0 / jnp.sqrt(fan_in)
        return jax.random.uniform(k, shape, jnp.float32, -bound, bound)

    return {
        # nn.Embedding default init: N(0, 1)
        "movie_emb": jax.random.normal(ks[0], (num_movies, emb_dim), jnp.float32),
        "year_emb":  jax.random.normal(ks[1], (num_years, emb_dim), jnp.float32),
        # nn.Linear(num_genres, emb_dim) -- stored as (in, out)
        "wg": lin_init(ks[2], num_genres, (num_genres, emb_dim)),
        "bg": lin_init(ks[3], num_genres, (1, emb_dim)),
        # nn.Linear(3*emb_dim, hidden) -- stored as (in, out)
        "w1": lin_init(ks[4], 3 * emb_dim, (3 * emb_dim, hidden)),
        "b1": lin_init(ks[5], 3 * emb_dim, (1, hidden)),
        # nn.Linear(hidden, emb_dim) -- stored as (in, out)
        "w2": lin_init(ks[6], hidden, (hidden, emb_dim)),
        "b2": lin_init(ks[7], hidden, (1, emb_dim)),
    }


def item_tower_forward(params, movie_id, genre_vec, year_id, *, block_b=8192):
    movie_emb = params["movie_emb"]
    year_emb = params["year_emb"]
    emb_dim = movie_emb.shape[1]
    hidden = params["w1"].shape[1]
    num_genres = params["wg"].shape[0]
    B = movie_id.shape[0]

    # ---------- wrapper-side algebra (tiny, once per call) ----------
    w1m = params["w1"][0 * emb_dim:1 * emb_dim, :]
    w1y = params["w1"][1 * emb_dim:2 * emb_dim, :]
    w1g = params["w1"][2 * emb_dim:3 * emb_dim, :]

    # Fold the genre Linear into layer 1:  genre @ wg @ w1g  ->  genre @ wg_fold
    wg_fold = params["wg"] @ w1g                   # (G, hidden)
    b1_fold = params["b1"] + params["bg"] @ w1g    # (1, hidden)

    k_in = 2 * emb_dim + num_genres                # 82
    KP = _round_up(k_in, 128)                      # 128 (MXU-aligned contraction depth)

    # Stacked first-layer weight; rows beyond k_in MUST be exactly zero.
    w1_full = jnp.zeros((KP, hidden), jnp.float32)
    w1_full = w1_full.at[0:emb_dim].set(w1m)
    w1_full = w1_full.at[emb_dim:2 * emb_dim].set(w1y)
    w1_full = w1_full.at[2 * emb_dim:k_in].set(wg_fold)
    w1_bf = w1_full.astype(jnp.bfloat16)

    w2_bf = params["w2"].astype(jnp.bfloat16)      # (hidden, emb_dim), exact output width
    b2 = params["b2"]                              # (1, emb_dim) f32

    # Embedding gathers + concat, built directly in bf16 at 82 cols (164 B/row).
    movie_vec = jnp.take(movie_emb.astype(jnp.bfloat16), movie_id, axis=0)
    year_vec = jnp.take(year_emb.astype(jnp.bfloat16), year_id, axis=0)
    x = jnp.concatenate(
        [movie_vec, year_vec, genre_vec.astype(jnp.bfloat16)], axis=-1)   # (B, 82)

    TB = _pick_tile(B, block_b)
    B_pad = _round_up(B, TB)
    if B_pad != B:
        x = jnp.pad(x, ((0, B_pad - B), (0, 0)))

    cost = pl.CostEstimate(
        flops=2 * B_pad * hidden * (KP + emb_dim),
        transcendentals=B_pad,                     # one rsqrt per row
        bytes_accessed=B_pad * (k_in * 2 + emb_dim * 4)
        + (KP * hidden + hidden * emb_dim) * 2 + (hidden + emb_dim) * 4,
    )

    out = pl.pallas_call(
        item_tower_kernel,
        out_shape=jax.ShapeDtypeStruct((B_pad, emb_dim), jnp.float32),
        grid_spec=pltpu.PrefetchScalarGridSpec(
            num_scalar_prefetch=0,
            grid=(B_pad // TB,),
            in_specs=[
                pl.BlockSpec((TB, k_in), lambda i: (i, 0)),          # x: tiled over batch
                pl.BlockSpec((KP, hidden), lambda i: (0, 0)),        # fused W1 (resident)
                pl.BlockSpec((1, hidden), lambda i: (0, 0)),         # b1'
                pl.BlockSpec((hidden, emb_dim), lambda i: (0, 0)),   # W2
                pl.BlockSpec((1, emb_dim), lambda i: (0, 0)),        # b2
            ],
            out_specs=pl.BlockSpec((TB, emb_dim), lambda i: (i, 0)),  # exact-width store
            scratch_shapes=[pltpu.VMEM((TB, KP), jnp.bfloat16)],      # lane-padded x tile
        ),
        compiler_params=pltpu.CompilerParams(
            dimension_semantics=("parallel",),
        ),
        cost_estimate=cost,
    )(x, w1_bf, b1_fold, w2_bf, b2)

    return out if B_pad == B else out[:B]


def reference_forward(params, movie_id, genre_vec, year_id):
    movie_vec = params["movie_emb"][movie_id]
    year_vec = params["year_emb"][year_id]
    g = genre_vec.astype(jnp.float32) @ params["wg"] + params["bg"]
    x = jnp.concatenate([movie_vec, year_vec, g], axis=-1)
    h = jnp.maximum(x @ params["w1"] + params["b1"], 0.0)
    out = h @ params["w2"] + params["b2"]
    n = jnp.sqrt(jnp.sum(out * out, axis=-1, keepdims=True))
    return out / jnp.maximum(n, 1e-12)


if __name__ == "__main__":
    num_movies, num_years, num_genres, emb_dim = 100, 30, 18, 32
    batch = 8

    key = jax.random.PRNGKey(0)
    kp, k1, k2, k3 = jax.random.split(key, 4)
    params = init_params(kp, num_movies, num_years, num_genres, emb_dim)

    movie_id = jax.random.randint(k1, (batch,), 0, num_movies, dtype=jnp.int32)
    year_id = jax.random.randint(k2, (batch,), 0, num_years, dtype=jnp.int32)
    genre_vec = (jax.random.uniform(k3, (batch, num_genres)) > 0.5).astype(jnp.float32)

    out = item_tower_forward(params, movie_id, genre_vec, year_id)
    out = jax.block_until_ready(out)

    ref = reference_forward(params, movie_id, genre_vec, year_id)
    assert out.shape == (batch, emb_dim)
    # Tolerance loosened vs f32 reference because matmul operands are bf16 on the MXU.
    assert jnp.allclose(out, ref, atol=2e-2, rtol=2e-2), "mismatch vs reference"
    # Outputs must be unit-norm rows.
    norms = jnp.sqrt(jnp.sum(out * out, axis=-1))
    assert jnp.allclose(norms, 1.0, atol=1e-3), "rows not L2-normalized"
    print("KERNEL_OK")
</pallas_src>

<mosaic_0001>
module attributes {stable_mosaic.version = 11 : i64} {
  func.func @item_tower_kernel(%arg0: i32, %arg1: memref<8x82xbf16, #tpu.memory_space<vmem>>, %arg2: memref<128x128xbf16, #tpu.memory_space<vmem>>, %arg3: memref<1x128xf32, #tpu.memory_space<vmem>>, %arg4: memref<128x32xbf16, #tpu.memory_space<vmem>>, %arg5: memref<1x32xf32, #tpu.memory_space<vmem>>, %arg6: memref<8x32xf32, #tpu.memory_space<vmem>>, %arg7: memref<8x128xbf16, #tpu.memory_space<vmem>>) attributes {dimension_semantics = [#tpu.dimension_semantics<parallel>], iteration_bounds = array<i64: 1>, scalar_prefetch = 0 : i64, scratch_operands = 1 : i64, tpu.core_type = #tpu.core_type<tc>, window_params = [{transform_indices = @transform_0, window_bounds = array<i64: 8, 82>}, {pipeline_mode = #tpu.pipeline_mode<synchronous>, transform_indices = @transform_1, window_bounds = array<i64: 128, 128>}, {pipeline_mode = #tpu.pipeline_mode<synchronous>, transform_indices = @transform_2, window_bounds = array<i64: 1, 128>}, {pipeline_mode = #tpu.pipeline_mode<synchronous>, transform_indices = @transform_3, window_bounds = array<i64: 128, 32>}, {pipeline_mode = #tpu.pipeline_mode<synchronous>, transform_indices = @transform_4, window_bounds = array<i64: 1, 32>}, {transform_indices = @transform_5, window_bounds = array<i64: 8, 32>}]} {
    %cst = arith.constant 0.000000e+00 : bf16
    %0 = vector.broadcast %cst : bf16 to vector<8x128xbf16>
    %c0 = arith.constant 0 : index
    %c0_0 = arith.constant 0 : index
    %1 = vector.load %arg7[%c0, %c0_0] : memref<8x128xbf16, #tpu.memory_space<vmem>>, vector<8x128xbf16>
    tpu.vector_store %arg7[%c0, %c0_0], %0 {strides = array<i32>} : memref<8x128xbf16, #tpu.memory_space<vmem>>, vector<8x128xbf16>,
    %c0_1 = arith.constant 0 : index
    %c0_2 = arith.constant 0 : index
    %2 = vector.load %arg1[%c0_1, %c0_2] : memref<8x82xbf16, #tpu.memory_space<vmem>>, vector<8x82xbf16>
    %c0_3 = arith.constant 0 : index
    %c0_4 = arith.constant 0 : index
    %3 = vector.load %arg7[%c0_3, %c0_4] : memref<8x128xbf16, #tpu.memory_space<vmem>>, vector<8x82xbf16>
    tpu.vector_store %arg7[%c0_3, %c0_4], %2 {strides = array<i32>} : memref<8x128xbf16, #tpu.memory_space<vmem>>, vector<8x82xbf16>,
    %c0_5 = arith.constant 0 : index
    %c0_6 = arith.constant 0 : index
    %4 = vector.load %arg7[%c0_5, %c0_6] : memref<8x128xbf16, #tpu.memory_space<vmem>>, vector<8x128xbf16>
    %c0_7 = arith.constant 0 : index
    %c0_8 = arith.constant 0 : index
    %5 = vector.load %arg2[%c0_7, %c0_8] : memref<128x128xbf16, #tpu.memory_space<vmem>>, vector<128x128xbf16>
    %cst_9 = arith.constant dense<0.000000e+00> : vector<8x128xf32>
    %6 = tpu.matmul %4, %5, %cst_9 {dimension_numbers = #tpu.dot_dimension_numbers<[1], [0], [0], [1], [0, 0, 1, 1], [], []>} : vector<8x128xbf16>, vector<128x128xbf16>, vector<8x128xf32> -> vector<8x128xf32>
    %c0_10 = arith.constant 0 : index
    %c0_11 = arith.constant 0 : index
    %7 = vector.load %arg3[%c0_10, %c0_11] : memref<1x128xf32, #tpu.memory_space<vmem>>, vector<1x128xf32>
    %8 = vector.broadcast %7 : vector<1x128xf32> to vector<8x128xf32>
    %9 = arith.addf %6, %8 : vector<8x128xf32>
    %cst_12 = arith.constant 0.000000e+00 : f32
    %10 = vector.broadcast %cst_12 : f32 to vector<8x128xf32>
    %11 = arith.maximumf %9, %10 : vector<8x128xf32>
    %12 = arith.truncf %11 : vector<8x128xf32> to vector<8x128xbf16>
    %c0_13 = arith.constant 0 : index
    %c0_14 = arith.constant 0 : index
    %13 = vector.load %arg4[%c0_13, %c0_14] : memref<128x32xbf16, #tpu.memory_space<vmem>>, vector<128x32xbf16>
    %cst_15 = arith.constant dense<0.000000e+00> : vector<8x32xf32>
    %14 = tpu.matmul %12, %13, %cst_15 {dimension_numbers = #tpu.dot_dimension_numbers<[1], [0], [0], [1], [0, 0, 1, 1], [], []>} : vector<8x128xbf16>, vector<128x32xbf16>, vector<8x32xf32> -> vector<8x32xf32>
    %c0_16 = arith.constant 0 : index
    %c0_17 = arith.constant 0 : index
    %15 = vector.load %arg5[%c0_16, %c0_17] : memref<1x32xf32, #tpu.memory_space<vmem>>, vector<1x32xf32>
    %16 = vector.broadcast %15 : vector<1x32xf32> to vector<8x32xf32>
    %17 = arith.addf %14, %16 : vector<8x32xf32>
    %18 = arith.mulf %17, %17 : vector<8x32xf32>
    %cst_18 = arith.constant dense<0.000000e+00> : vector<8xf32>
    %19 = vector.multi_reduction <add>, %18, %cst_18 [1] : vector<8x32xf32> to vector<8xf32>
    %20 = vector.shape_cast %19 : vector<8xf32> to vector<8x1xf32>
    %cst_19 = arith.constant 1.000000e-24 : f32
    %21 = vector.broadcast %cst_19 : f32 to vector<8x1xf32>
    %22 = arith.maximumf %20, %21 : vector<8x1xf32>
    %23 = math.rsqrt %22 : vector<8x1xf32>
    %24 = vector.broadcast %23 : vector<8x1xf32> to vector<8x32xf32>
    %25 = arith.mulf %17, %24 : vector<8x32xf32>
    %c0_20 = arith.constant 0 : index
    %c0_21 = arith.constant 0 : index
    %26 = vector.load %arg6[%c0_20, %c0_21] : memref<8x32xf32, #tpu.memory_space<vmem>>, vector<8x32xf32>
    tpu.vector_store %arg6[%c0_20, %c0_21], %25 {strides = array<i32>} : memref<8x32xf32, #tpu.memory_space<vmem>>, vector<8x32xf32>,
    return
  }
  func.func @transform_0(%arg0: i32) -> (i32, i32) {
    %c0_i32 = arith.constant 0 : i32
    %c0_i32_0 = arith.constant 0 : i32
    return %arg0, %c0_i32 : i32, i32
  }
  func.func @transform_1(%arg0: i32) -> (i32, i32) {
    %c0_i32 = arith.constant 0 : i32
    %c0_i32_0 = arith.constant 0 : i32
    %c0_i32_1 = arith.constant 0 : i32
    return %c0_i32, %c0_i32_0 : i32, i32
  }
  func.func @transform_2(%arg0: i32) -> (i32, i32) {
    %c0_i32 = arith.constant 0 : i32
    %c0_i32_0 = arith.constant 0 : i32
    %c0_i32_1 = arith.constant 0 : i32
    return %c0_i32, %c0_i32_0 : i32, i32
  }
  func.func @transform_3(%arg0: i32) -> (i32, i32) {
    %c0_i32 = arith.constant 0 : i32
    %c0_i32_0 = arith.constant 0 : i32
    %c0_i32_1 = arith.constant 0 : i32
    return %c0_i32, %c0_i32_0 : i32, i32
  }
  func.func @transform_4(%arg0: i32) -> (i32, i32) {
    %c0_i32 = arith.constant 0 : i32
    %c0_i32_0 = arith.constant 0 : i32
    %c0_i32_1 = arith.constant 0 : i32
    return %c0_i32, %c0_i32_0 : i32, i32
  }
  func.func @transform_5(%arg0: i32) -> (i32, i32) {
    %c0_i32 = arith.constant 0 : i32
    %c0_i32_0 = arith.constant 0 : i32
    return %arg0, %c0_i32 : i32, i32
  }
}

</mosaic_0001>

<llo_original>
// kernel: tpu_custom_call.1
$region0: #{tpu_custom_call.1}
  #allocation0 [shape = 'u32[]', space=smem, size = 0x4, offset = 0x4, fixed_abs, tag = 'smem constant byte address 0x4 - core index']
  #allocation1 [shape = 'u32[144,128]{1,0:T(1,128)}', space=vmem, size = 0x12000, scoped, tag = 'internal scratch']
  #allocation2 [shape = 'bf16[8,128]{1,0:T(8,128)(2,1)}', space=vmem, size = 0x800, scoped, tag = 'scratch operand']
  %s0 = inlined_call_operand.vmem [shape: bf16[8,82], index: 0, kind: input, shape index: {}]
  %s1 = inlined_call_operand.vmem [shape: bf16[128,128], index: 1, kind: input, shape index: {}]
  %s2 = inlined_call_operand.vmem [shape: f32[1,128], index: 2, kind: input, shape index: {}]
  %s3 = inlined_call_operand.vmem [shape: bf16[128,32], index: 3, kind: input, shape index: {}]
  %s4 = inlined_call_operand.vmem [shape: f32[1,32], index: 4, kind: input, shape index: {}]
  %s5 = inlined_call_operand.hbm [shape: f32[8,32], index: 5, kind: output, shape index: {}]
  %s6 = sld [smem:[#allocation0]]
  $region30: #{tpu_custom_call.1} parent=0
    _
  %s8 = ssub.s32 1, %s6
  %s9 = scalar_select 0, %s8, %s6
  $region1: #{tpu_custom_call.1} parent=0
    #allocation3 [shape = 'u8[4096]{0}', space=vmem, size = 0x1000, scoped, tag = 'output window, operand 0, single buffered']
    #allocation4 [shape = 's32[1]{0}', space=sflag, size = 0x4, scoped, tag = 'scoped memory for tpu_custom_call.1']
    %10 = vsyncpa [#allocation4], 0
    // Predicated region
    $region2: #{tpu_custom_call.1} parent=1 // pred_check
      _
    $region3: #{tpu_custom_call.1} parent=1 // pred_check_branch
      %12 = sbr.rel (0) target = $region5
    $region4: #{tpu_custom_call.1} parent=1 // pred_region
      _
    $region5: #{tpu_custom_call.1} parent=1 // pred_fallthru
      _
    // Predicated region
    $region6: #{tpu_custom_call.1} parent=1 // pred_check
      _
    $region7: #{tpu_custom_call.1} parent=1 // pred_check_branch
      %14 = sbr.rel (0) target = $region9
    $region8: #{tpu_custom_call.1} parent=1 // pred_region
      _
    $region9: #{tpu_custom_call.1} parent=1 // pred_fallthru
      _
    // Predicated region
    $region10: #{tpu_custom_call.1} parent=1 // pred_check
      _
    $region11: #{tpu_custom_call.1} parent=1 // pred_check_branch
      %16 = sbr.rel (0) target = $region13
    $region12: #{tpu_custom_call.1} parent=1 // pred_region
      _
    $region13: #{tpu_custom_call.1} parent=1 // pred_fallthru
      _
    // Predicated region
    $region14: #{tpu_custom_call.1} parent=1 // pred_check
      _
    $region15: #{tpu_custom_call.1} parent=1 // pred_check_branch
      %18 = sbr.rel (0) target = $region17
    $region16: #{tpu_custom_call.1} parent=1 // pred_region
      _
    $region17: #{tpu_custom_call.1} parent=1 // pred_fallthru
      _
    // Predicated region
    $region18: #{tpu_custom_call.1} parent=1 // pred_check
      _
    $region19: #{tpu_custom_call.1} parent=1 // pred_check_branch
      %20 = sbr.rel (0) target = $region21
    $region20: #{tpu_custom_call.1} parent=1 // pred_region
      _
    $region21: #{tpu_custom_call.1} parent=1 // pred_fallthru
      _
    %22 = vst [vmem:[#allocation2] sm:$0xf] 0
    %v23 = vld [vmem:[%s0] sm:$0xf]
    %vm24 = vcmask 666624
    %25 = vst.msk [vmem:[#allocation2] sm:$0xf] %vm24, %v23
    %v26 = vld [vmem:[#allocation2] sm:$0xf]
    %v27 = vld [vmem:[%s1] sm:$0xf]
    %v28 = vld [vmem:[%s1 + $0x4] sm:$0xf]
    %v29 = vld [vmem:[%s1 + $0x8] sm:$0xf]
    %v30 = vld [vmem:[%s1 + $0xc] sm:$0xf]
    %v31 = vld [vmem:[%s1 + $0x10] sm:$0xf]
    %v32 = vld [vmem:[%s1 + $0x14] sm:$0xf]
    %v33 = vld [vmem:[%s1 + $0x18] sm:$0xf]
    %v34 = vld [vmem:[%s1 + $0x1c] sm:$0xf]
    %v35 = vld [vmem:[%s1 + $0x20] sm:$0xf]
    %v36 = vld [vmem:[%s1 + $0x24] sm:$0xf]
    %v37 = vld [vmem:[%s1 + $0x28] sm:$0xf]
    %v38 = vld [vmem:[%s1 + $0x2c] sm:$0xf]
    %v39 = vld [vmem:[%s1 + $0x30] sm:$0xf]
    %v40 = vld [vmem:[%s1 + $0x34] sm:$0xf]
    %v41 = vld [vmem:[%s1 + $0x38] sm:$0xf]
    %v42 = vld [vmem:[%s1 + $0x3c] sm:$0xf]
    %v43 = vld [vmem:[%s2] sm:$0x1]
    %v45 = vlaneseq
    %v46 = vshrl.u32 %v45, 7
    %v47 = vsub.s32 0, %v46
    %v48 = vrot.slane %v43, %v47
    %v66 = vunpack.c.l.b16 %v27
    %v67 = vunpack.c.l.b16 %v28
    %v68 = vunpack.c.l.b16 %v29
    %v69 = vunpack.c.l.b16 %v30
    %v70 = vunpack.c.l.b16 %v31
    %v71 = vunpack.c.l.b16 %v32
    %v72 = vunpack.c.l.b16 %v33
    %v73 = vunpack.c.l.b16 %v34
    %v74 = vunpack.c.l.b16 %v35
    %v75 = vunpack.c.l.b16 %v36
    %v76 = vunpack.c.l.b16 %v37
    %v77 = vunpack.c.l.b16 %v38
    %v78 = vunpack.c.l.b16 %v39
    %v79 = vunpack.c.l.b16 %v40
    %v80 = vunpack.c.l.b16 %v41
    %v81 = vunpack.c.l.b16 %v42
    %v82 = vpack.c.b16 %v67, %v66
    %v83 = vpack.c.b16 %v69, %v68
    %v84 = vpack.c.b16 %v71, %v70
    %v85 = vpack.c.b16 %v73, %v72
    %v86 = vpack.c.b16 %v75, %v74
    %v87 = vpack.c.b16 %v77, %v76
    %v88 = vpack.c.b16 %v79, %v78
    %v89 = vpack.c.b16 %v81, %v80
    %98 = vmatprep.subr.bf16.mxu0 0
    %99 = vmatpush1.bf16.msra.mxu0 %v89
    %100 = vmatprep.subr.bf16.mxu0 0
    %101 = vmatpush1.bf16.msra.mxu0 %v88
    %102 = vmatprep.subr.bf16.mxu0 0
    %103 = vmatpush1.bf16.msra.mxu0 %v87
    %104 = vmatprep.subr.bf16.mxu0 0
    %105 = vmatpush1.bf16.msra.mxu0 %v86
    %106 = vmatprep.subr.bf16.mxu0 0
    %107 = vmatpush1.bf16.msra.mxu0 %v85
    %108 = vmatprep.subr.bf16.mxu0 0
    %109 = vmatpush1.bf16.msra.mxu0 %v84
    %110 = vmatprep.subr.bf16.mxu0 0
    %111 = vmatpush1.bf16.msra.mxu0 %v83
    %112 = vmatprep.subr.bf16.mxu0 0
    %113 = vmatpush1.bf16.msra.mxu0 %v82
    %114 = vmatprep.subr.bf16.mxu0 0
    %115 = vmatpush2.bf16.msra.mxu0 0
    %116 = vmatprep.subr.bf16.mxu0 0
    %117 = vmatpush2.bf16.msra.mxu0 0
    %118 = vmatprep.subr.bf16.mxu0 0
    %119 = vmatpush2.bf16.msra.mxu0 0
    %120 = vmatprep.subr.bf16.mxu0 0
    %121 = vmatpush2.bf16.msra.mxu0 0
    %122 = vmatprep.subr.bf16.mxu0 0
    %123 = vmatpush2.bf16.msra.mxu0 0
    %124 = vmatprep.subr.bf16.mxu0 0
    %125 = vmatpush2.bf16.msra.mxu0 0
    %126 = vmatprep.subr.bf16.mxu0 0
    %127 = vmatpush2.bf16.msra.mxu0 0
    %128 = vmatprep.subr.bf16.mxu0 0
    %129 = vmatpush2.bf16.msra.mxu0 0
    %130 = vmatprep.mubr.bf16.mxu0 0
    %131 = vmatmul.mubr.bf16.gmra.mxu0 %v26
    %v132 = vpop.f32.mrf.mxu0
    %v133 = vadd.f32 %v48, %v132
    %v134 = vpop.f32.mrf.mxu0
    %v135 = vpop.f32.mrf.mxu0
    %v136 = vpop.f32.mrf.mxu0
    %137 = vdwg.mxu0
    %v138 = vmax.f32 %v133, 0.0
    %v139 = vpack.c.bf16 %v138, %v138
    %v140 = vld [vmem:[%s3] sm:$0xf]
    %v141 = vld [vmem:[%s3 + $0x4] sm:$0xf]
    %v142 = vld [vmem:[%s3 + $0x8] sm:$0xf]
    %v143 = vld [vmem:[%s3 + $0xc] sm:$0xf]
    %v144 = vld [vmem:[%s3 + $0x10] sm:$0xf]
    %v145 = vld [vmem:[%s3 + $0x14] sm:$0xf]
    %v146 = vld [vmem:[%s3 + $0x18] sm:$0xf]
    %v147 = vld [vmem:[%s3 + $0x1c] sm:$0xf]
    %v148 = vld [vmem:[%s3 + $0x20] sm:$0xf]
    %v149 = vld [vmem:[%s3 + $0x24] sm:$0xf]
    %v150 = vld [vmem:[%s3 + $0x28] sm:$0xf]
    %v151 = vld [vmem:[%s3 + $0x2c] sm:$0xf]
    %v152 = vld [vmem:[%s3 + $0x30] sm:$0xf]
    %v153 = vld [vmem:[%s3 + $0x34] sm:$0xf]
    %v154 = vld [vmem:[%s3 + $0x38] sm:$0xf]
    %v155 = vld [vmem:[%s3 + $0x3c] sm:$0xf]
    %v156 = vld [vmem:[%s4] sm:$0x1]
    %v158 = vlaneseq
    %v159 = vshrl.u32 %v158, 7
    %v160 = vsub.s32 0, %v159
    %v161 = vrot.slane %v156, %v160
    %v179 = vunpack.c.l.b16 %v140
    %v180 = vunpack.c.l.b16 %v141
    %v181 = vunpack.c.l.b16 %v142
    %v182 = vunpack.c.l.b16 %v143
    %v183 = vunpack.c.l.b16 %v144
    %v184 = vunpack.c.l.b16 %v145
    %v185 = vunpack.c.l.b16 %v146
    %v186 = vunpack.c.l.b16 %v147
    %v187 = vunpack.c.l.b16 %v148
    %v188 = vunpack.c.l.b16 %v149
    %v189 = vunpack.c.l.b16 %v150
    %v190 = vunpack.c.l.b16 %v151
    %v191 = vunpack.c.l.b16 %v152
    %v192 = vunpack.c.l.b16 %v153
    %v193 = vunpack.c.l.b16 %v154
    %v194 = vunpack.c.l.b16 %v155
    %v195 = vpack.c.b16 %v180, %v179
    %v196 = vpack.c.b16 %v182, %v181
    %v197 = vpack.c.b16 %v184, %v183
    %v198 = vpack.c.b16 %v186, %v185
    %v199 = vpack.c.b16 %v188, %v187
    %v200 = vpack.c.b16 %v190, %v189
    %v201 = vpack.c.b16 %v192, %v191
    %v202 = vpack.c.b16 %v194, %v193
    %211 = vmatprep.subr.bf16.mxu0 0
    %212 = vmatpush1.bf16.msra.mxu0 %v202
    %213 = vmatprep.subr.bf16.mxu0 0
    %214 = vmatpush1.bf16.msra.mxu0 %v201
    %215 = vmatprep.subr.bf16.mxu0 0
    %216 = vmatpush1.bf16.msra.mxu0 %v200
    %217 = vmatprep.subr.bf16.mxu0 0
    %218 = vmatpush1.bf16.msra.mxu0 %v199
    %219 = vmatprep.subr.bf16.mxu0 0
    %220 = vmatpush1.bf16.msra.mxu0 %v198
    %221 = vmatprep.subr.bf16.mxu0 0
    %222 = vmatpush1.bf16.msra.mxu0 %v197
    %223 = vmatprep.subr.bf16.mxu0 0
    %224 = vmatpush1.bf16.msra.mxu0 %v196
    %225 = vmatprep.subr.bf16.mxu0 0
    %226 = vmatpush1.bf16.msra.mxu0 %v195
    %227 = vmatprep.subr.bf16.mxu0 0
    %228 = vmatpush2.bf16.msra.mxu0 0
    %229 = vmatprep.subr.bf16.mxu0 0
    %230 = vmatpush2.bf16.msra.mxu0 0
    %231 = vmatprep.subr.bf16.mxu0 0
    %232 = vmatpush2.bf16.msra.mxu0 0
    %233 = vmatprep.subr.bf16.mxu0 0
    %234 = vmatpush2.bf16.msra.mxu0 0
    %235 = vmatprep.subr.bf16.mxu0 0
    %236 = vmatpush2.bf16.msra.mxu0 0
    %237 = vmatprep.subr.bf16.mxu0 0
    %238 = vmatpush2.bf16.msra.mxu0 0
    %239 = vmatprep.subr.bf16.mxu0 0
    %240 = vmatpush2.bf16.msra.mxu0 0
    %241 = vmatprep.subr.bf16.mxu0 0
    %242 = vmatpush2.bf16.msra.mxu0 0
    %243 = vmatprep.mubr.bf16.mxu0 0
    %244 = vmatmul.mubr.bf16.gmra.mxu0 %v139
    %v245 = vpop.f32.mrf.mxu0
    %v246 = vadd.f32 %v161, %v245
    %v247 = vpop.f32.mrf.mxu0
    %v248 = vpop.f32.mrf.mxu0
    %v249 = vpop.f32.mrf.mxu0
    %250 = vdwg.mxu0
    %v251 = vmul.f32 %v246, %v246
    %vm252 = vcmask 261120
    %v253 = vsel %vm252, %v251, 0.0
    %254 = vadd.xlane.f32.xlu0 %v253
    %v255 = vpop.xlane.xlu0 %254
    %v256 = vmax.f32 %v255, 1e-24
    %v257 = vrsqrt.pop %v256
    %v258 = vmul.f32 %v246, %v257
    %259 = vst.msk [vmem:[#allocation3] sm:$0xff] %vm252, %v258
    // Predicated region
    $region22: #{tpu_custom_call.1} parent=1 // pred_check
      _
    $region23: #{tpu_custom_call.1} parent=1 // pred_check_branch
      %261 = sbr.rel (0) target = $region25
    $region24: #{tpu_custom_call.1} parent=1 // pred_region
      %s263 = ssub.s32 128, 128
      %264 = vsyncadd [#allocation4], %s263
      %s266 = sshll.u32 [#allocation3], 4
      %s267 = int_to_ptr.vmem [resolvable:$true] %s266
      %269 = dma.vmem_to_hbm [thread:$0]  %s267, 128, %s5, [#allocation4]
    $region25: #{tpu_custom_call.1} parent=1 // pred_fallthru
      _
    // Predicated region
    $region26: #{tpu_custom_call.1} parent=1 // pred_check
      _
    $region27: #{tpu_custom_call.1} parent=1 // pred_check_branch
      %271 = sbr.rel (0) target = $region29
    $region28: #{tpu_custom_call.1} parent=1 // pred_region
      %272 = dma.done [#allocation4], 128
    $region29: #{tpu_custom_call.1} parent=1 // pred_fallthru
      _
    %273 = vsyncpa [#allocation4], 1

</llo_original>
